<compile_context>
chip_gen: v7x
topology: tpu7x:2x2x1
jax: 0.10.0
libtpu: 0.0.40
codegen_flags: <defaults>
</compile_context>

<pallas_src>
import jax
import jax.numpy as jnp
from jax.experimental import pallas as pl
from jax.experimental.pallas import tpu as pltpu


def _round_up(x, m):
    return ((x + m - 1) // m) * m


def transform_net_kernel(x_ref, w1t_ref, w2t_ref, o_ref, acc_ref):
    """One (batch tile, hidden tile) grid step.

    x_ref  : (bm, x_dim_p)     batch tile (compute dtype)
    w1t_ref: (x_dim_p, bh)     slice of W1^T (pre-transposed in wrapper)
    w2t_ref: (bh, x_dim_p)     slice of W2^T (pre-transposed in wrapper)
    o_ref  : (bm, x_dim_p)     output tile (written on last hidden step)
    acc_ref: (bm, x_dim_p) f32 VMEM accumulator (resident across hidden axis)
    """
    k = pl.program_id(1)

    @pl.when(k == 0)
    def _init():
        acc_ref[...] = jnp.zeros_like(acc_ref)

    # First Linear (MXU) + ReLU (VPU). ReLU is elementwise over the hidden
    # dim, so tiling the hidden dim and accumulating is exact.
    h = jnp.dot(x_ref[...], w1t_ref[...], preferred_element_type=jnp.float32)
    h = jnp.maximum(h, 0.0)

    # Second Linear (MXU), accumulate in f32.
    acc_ref[...] += jnp.dot(h.astype(w2t_ref.dtype), w2t_ref[...],
                            preferred_element_type=jnp.float32)

    @pl.when(k == pl.num_programs(1) - 1)
    def _finalize():
        o_ref[...] = acc_ref[...].astype(o_ref.dtype)


def transform_net_forward(x, w1, w2, *, bm=256, bh=512,
                          compute_dtype=jnp.bfloat16):
    """Pallas forward for TransformNet(x_dim, h_dim, num_layers=2).

    x : (M, x_dim)
    w1: (h_dim, x_dim)  -- nn.Linear(x_dim, h_dim, bias=False).weight
    w2: (x_dim, h_dim)  -- nn.Linear(h_dim, x_dim, bias=False).weight
    """
    M, x_dim = x.shape
    h_dim = w1.shape[0]
    assert w1.shape == (h_dim, x_dim)
    assert w2.shape == (x_dim, h_dim)
    out_dtype = x.dtype
    cd = compute_dtype

    # Lane-dense feature padding (multiples of 128).
    x_dim_p = _round_up(x_dim, 128)
    bh = max(128, _round_up(min(bh, _round_up(h_dim, 128)), 128))
    h_dim_p = _round_up(h_dim, bh)

    # Batch tile: multiple of 8; collapse tiny problems to a single grid step.
    bm = _round_up(min(bm, _round_up(M, 8)), 8)
    m_p = _round_up(M, bm)

    # One-time layout plumbing (outside the kernel): cast, transpose, pad.
    xp = jnp.zeros((m_p, x_dim_p), cd).at[:M, :x_dim].set(x.astype(cd))
    w1t = jnp.zeros((x_dim_p, h_dim_p), cd).at[:x_dim, :h_dim].set(
        w1.T.astype(cd))
    w2t = jnp.zeros((h_dim_p, x_dim_p), cd).at[:h_dim, :x_dim].set(
        w2.T.astype(cd))

    grid = (m_p // bm, h_dim_p // bh)

    out_p = pl.pallas_call(
        transform_net_kernel,
        out_shape=jax.ShapeDtypeStruct((m_p, x_dim_p), out_dtype),
        grid_spec=pltpu.PrefetchScalarGridSpec(
            num_scalar_prefetch=0,
            grid=grid,
            in_specs=[
                # batch tile of x; constant over the hidden (reduction) axis
                pl.BlockSpec((bm, x_dim_p), lambda i, k: (i, 0)),
                # hidden-sliced, pre-transposed weights
                pl.BlockSpec((x_dim_p, bh), lambda i, k: (0, k)),
                pl.BlockSpec((bh, x_dim_p), lambda i, k: (k, 0)),
            ],
            out_specs=pl.BlockSpec((bm, x_dim_p), lambda i, k: (i, 0)),
            scratch_shapes=[pltpu.VMEM((bm, x_dim_p), jnp.float32)],
        ),
        compiler_params=pltpu.CompilerParams(
            # batch axis shards across v7x's 2 TCs; hidden axis is a reduction
            dimension_semantics=("parallel", "arbitrary"),
            # <= physical VMEM on v7x (64 MiB); gives headroom over the
            # 16/32 MiB scoped defaults on v5e/v6e for large bm / weights.
            vmem_limit_bytes=64 * 1024 * 1024,
        ),
    )(xp, w1t, w2t)

    # Slice away batch and feature padding.
    return out_p[:M, :x_dim]


def init_transform_net_params(key, x_dim, h_dim):
    """Deterministic synthetic init mirroring nn.Linear's 1/sqrt(fan_in) scale."""
    k1, k2 = jax.random.split(key)
    bound1 = 1.0 / jnp.sqrt(jnp.float32(x_dim))
    bound2 = 1.0 / jnp.sqrt(jnp.float32(h_dim))
    w1 = jax.random.uniform(k1, (h_dim, x_dim), jnp.float32, -bound1, bound1)
    w2 = jax.random.uniform(k2, (x_dim, h_dim), jnp.float32, -bound2, bound2)
    return w1, w2


if __name__ == "__main__":
    key = jax.random.PRNGKey(0)
    kx, kp, kx2 = jax.random.split(key, 3)

    batch, x_dim, h_dim = 16, 16, 32          # num_layers=2 (module default)
    x = jax.random.normal(kx, (batch, x_dim), jnp.float32)
    w1, w2 = init_transform_net_params(kp, x_dim, h_dim)

    ref = jnp.maximum(x @ w1.T, 0.0) @ w2.T

    # f32 compute path: bit-accurate-ish vs the f32 reference.
    out_f32 = jax.block_until_ready(
        transform_net_forward(x, w1, w2, compute_dtype=jnp.float32))
    assert out_f32.shape == (batch, x_dim)
    assert jnp.allclose(out_f32, ref, atol=1e-5, rtol=1e-5)

    # Default bf16 MXU path (f32 accumulation): looser tolerance.
    out_bf16 = jax.block_until_ready(transform_net_forward(x, w1, w2))
    assert out_bf16.shape == (batch, x_dim)
    assert jnp.allclose(out_bf16, ref, atol=5e-2, rtol=5e-2)

    # Ragged batch: exercises wrapper-side padding (no divisibility assert).
    x2 = jax.random.normal(kx2, (10, x_dim), jnp.float32)
    ref2 = jnp.maximum(x2 @ w1.T, 0.0) @ w2.T
    out2 = jax.block_until_ready(
        transform_net_forward(x2, w1, w2, compute_dtype=jnp.float32))
    assert jnp.allclose(out2, ref2, atol=1e-5, rtol=1e-5)

    print("KERNEL_OK")
</pallas_src>

<mosaic_0001>
module attributes {stable_mosaic.version = 11 : i64} {
  func.func @transform_net_kernel(%arg0: i32, %arg1: i32, %arg2: memref<16x128xf32, #tpu.memory_space<vmem>>, %arg3: memref<128x128xf32, #tpu.memory_space<vmem>>, %arg4: memref<128x128xf32, #tpu.memory_space<vmem>>, %arg5: memref<16x128xf32, #tpu.memory_space<vmem>>, %arg6: memref<16x128xf32, #tpu.memory_space<vmem>>) attributes {dimension_semantics = [#tpu.dimension_semantics<parallel>, #tpu.dimension_semantics<arbitrary>], iteration_bounds = array<i64: 1, 1>, scalar_prefetch = 0 : i64, scratch_operands = 1 : i64, tpu.core_type = #tpu.core_type<tc>, window_params = [{transform_indices = @transform_0, window_bounds = array<i64: 16, 128>}, {transform_indices = @transform_1, window_bounds = array<i64: 128, 128>}, {transform_indices = @transform_2, window_bounds = array<i64: 128, 128>}, {transform_indices = @transform_3, window_bounds = array<i64: 16, 128>}]} {
    %c0_i32 = arith.constant 0 : i32
    %0 = arith.cmpi eq, %arg1, %c0_i32 : i32
    %1 = arith.extui %0 : i1 to i32
    %c0_i32_0 = arith.constant 0 : i32
    %2 = arith.cmpi ne, %1, %c0_i32_0 : i32
    scf.if %2 {
      %cst_14 = arith.constant 0.000000e+00 : f32
      %16 = vector.broadcast %cst_14 : f32 to vector<16x128xf32>
      %c0_15 = arith.constant 0 : index
      %c0_16 = arith.constant 0 : index
      %17 = vector.load %arg6[%c0_15, %c0_16] : memref<16x128xf32, #tpu.memory_space<vmem>>, vector<16x128xf32>
      tpu.vector_store %arg6[%c0_15, %c0_16], %16 {strides = array<i32>} : memref<16x128xf32, #tpu.memory_space<vmem>>, vector<16x128xf32>,
    } else {
    }
    %c0 = arith.constant 0 : index
    %c0_1 = arith.constant 0 : index
    %3 = vector.load %arg2[%c0, %c0_1] : memref<16x128xf32, #tpu.memory_space<vmem>>, vector<16x128xf32>
    %c0_2 = arith.constant 0 : index
    %c0_3 = arith.constant 0 : index
    %4 = vector.load %arg3[%c0_2, %c0_3] : memref<128x128xf32, #tpu.memory_space<vmem>>, vector<128x128xf32>
    %cst = arith.constant dense<0.000000e+00> : vector<16x128xf32>
    %5 = tpu.matmul %3, %4, %cst {dimension_numbers = #tpu.dot_dimension_numbers<[1], [0], [0], [1], [0, 0, 1, 1], [], []>} : vector<16x128xf32>, vector<128x128xf32>, vector<16x128xf32> -> vector<16x128xf32>
    %cst_4 = arith.constant 0.000000e+00 : f32
    %6 = vector.broadcast %cst_4 : f32 to vector<16x128xf32>
    %7 = arith.maximumf %5, %6 : vector<16x128xf32>
    %c0_5 = arith.constant 0 : index
    %c0_6 = arith.constant 0 : index
    %8 = vector.load %arg6[%c0_5, %c0_6] : memref<16x128xf32, #tpu.memory_space<vmem>>, vector<16x128xf32>
    %c0_7 = arith.constant 0 : index
    %c0_8 = arith.constant 0 : index
    %9 = vector.load %arg4[%c0_7, %c0_8] : memref<128x128xf32, #tpu.memory_space<vmem>>, vector<128x128xf32>
    %cst_9 = arith.constant dense<0.000000e+00> : vector<16x128xf32>
    %10 = tpu.matmul %7, %9, %cst_9 {dimension_numbers = #tpu.dot_dimension_numbers<[1], [0], [0], [1], [0, 0, 1, 1], [], []>} : vector<16x128xf32>, vector<128x128xf32>, vector<16x128xf32> -> vector<16x128xf32>
    %11 = arith.addf %8, %10 : vector<16x128xf32>
    %c0_10 = arith.constant 0 : index
    %c0_11 = arith.constant 0 : index
    %12 = vector.load %arg6[%c0_10, %c0_11] : memref<16x128xf32, #tpu.memory_space<vmem>>, vector<16x128xf32>
    tpu.vector_store %arg6[%c0_10, %c0_11], %11 {strides = array<i32>} : memref<16x128xf32, #tpu.memory_space<vmem>>, vector<16x128xf32>,
    %c0_i32_12 = arith.constant 0 : i32
    %13 = arith.cmpi eq, %arg1, %c0_i32_12 : i32
    %14 = arith.extui %13 : i1 to i32
    %c0_i32_13 = arith.constant 0 : i32
    %15 = arith.cmpi ne, %14, %c0_i32_13 : i32
    scf.if %15 {
      %c0_14 = arith.constant 0 : index
      %c0_15 = arith.constant 0 : index
      %16 = vector.load %arg6[%c0_14, %c0_15] : memref<16x128xf32, #tpu.memory_space<vmem>>, vector<16x128xf32>
      %c0_16 = arith.constant 0 : index
      %c0_17 = arith.constant 0 : index
      %17 = vector.load %arg5[%c0_16, %c0_17] : memref<16x128xf32, #tpu.memory_space<vmem>>, vector<16x128xf32>
      tpu.vector_store %arg5[%c0_16, %c0_17], %16 {strides = array<i32>} : memref<16x128xf32, #tpu.memory_space<vmem>>, vector<16x128xf32>,
    } else {
    }
    return
  }
  func.func @transform_0(%arg0: i32, %arg1: i32) -> (i32, i32) {
    %c0_i32 = arith.constant 0 : i32
    %c0_i32_0 = arith.constant 0 : i32
    return %arg0, %c0_i32 : i32, i32
  }
  func.func @transform_1(%arg0: i32, %arg1: i32) -> (i32, i32) {
    %c0_i32 = arith.constant 0 : i32
    %c0_i32_0 = arith.constant 0 : i32
    return %c0_i32, %arg1 : i32, i32
  }
  func.func @transform_2(%arg0: i32, %arg1: i32) -> (i32, i32) {
    %c0_i32 = arith.constant 0 : i32
    %c0_i32_0 = arith.constant 0 : i32
    return %arg1, %c0_i32 : i32, i32
  }
  func.func @transform_3(%arg0: i32, %arg1: i32) -> (i32, i32) {
    %c0_i32 = arith.constant 0 : i32
    %c0_i32_0 = arith.constant 0 : i32
    return %arg0, %c0_i32 : i32, i32
  }
}

</mosaic_0001>

<llo_original>
// kernel: tpu_custom_call.1
$region0: #{tpu_custom_call.1}
  #allocation0 [shape = 'u32[]', space=smem, size = 0x4, offset = 0x4, fixed_abs, tag = 'smem constant byte address 0x4 - core index']
  #allocation1 [shape = 'u32[144,128]{1,0:T(1,128)}', space=vmem, size = 0x12000, scoped, tag = 'internal scratch']
  #allocation2 [shape = 'f32[16,128]{1,0:T(8,128)}', space=vmem, size = 0x2000, scoped, tag = 'scratch operand']
  %s0 = inlined_call_operand.hbm [shape: f32[16,128], index: 0, kind: input, shape index: {}]
  %s1 = inlined_call_operand.hbm [shape: f32[128,128], index: 1, kind: input, shape index: {}]
  %s2 = inlined_call_operand.hbm [shape: f32[128,128], index: 2, kind: input, shape index: {}]
  %s3 = inlined_call_operand.hbm [shape: f32[16,128], index: 3, kind: output, shape index: {}]
  %s4 = sld [smem:[#allocation0]]
  $region42: #{tpu_custom_call.1} parent=0
    _
  %s6 = ssub.s32 1, %s4
  %s7 = scalar_select 0, %s6, %s4
  $region1: #{tpu_custom_call.1} parent=0
    #allocation3 [shape = 'u8[8192]{0}', space=vmem, size = 0x2000, scoped, tag = 'input window, operand 0, single buffered']
    #allocation4 [shape = 's32[1]{0}', space=sflag, size = 0x4, scoped, tag = 'scoped memory for tpu_custom_call.1']
    #allocation5 [shape = 's32[1]{0}', space=sflag, size = 0x4, scoped, tag = 'scoped memory for tpu_custom_call.1']
    #allocation6 [shape = 'u8[65536]{0}', space=vmem, size = 0x10000, scoped, tag = 'input window, operand 1, single buffered']
    #allocation7 [shape = 's32[1]{0}', space=sflag, size = 0x4, scoped, tag = 'scoped memory for tpu_custom_call.1']
    #allocation8 [shape = 'u8[65536]{0}', space=vmem, size = 0x10000, scoped, tag = 'input window, operand 2, single buffered']
    #allocation9 [shape = 'u8[8192]{0}', space=vmem, size = 0x2000, scoped, tag = 'output window, operand 0, single buffered']
    %8 = vsyncpa [#allocation4], 0
    %9 = vsyncpa [#allocation7], 0
    %10 = vsyncpa [#allocation5], 0
    // Predicated region
    $region2: #{tpu_custom_call.1} parent=1 // pred_check
      _
    $region3: #{tpu_custom_call.1} parent=1 // pred_check_branch
      %12 = sbr.rel (0) target = $region5
    $region4: #{tpu_custom_call.1} parent=1 // pred_region
      %s14 = ssub.s32 256, 256
      %15 = vsyncadd [#allocation4], %s14
      %s16 = sshll.u32 [#allocation3], 4
      %s17 = int_to_ptr.vmem [resolvable:$true] %s16
      %22 = dma.hbm_to_vmem [thread:$0]  %s0, 256, %s17, [#allocation4], 128, 128, 8
    $region5: #{tpu_custom_call.1} parent=1 // pred_fallthru
      _
    // Predicated region
    $region6: #{tpu_custom_call.1} parent=1 // pred_check
      _
    $region7: #{tpu_custom_call.1} parent=1 // pred_check_branch
      %24 = sbr.rel (0) target = $region9
    $region8: #{tpu_custom_call.1} parent=1 // pred_region
      %s26 = ssub.s32 2048, 2048
      %27 = vsyncadd [#allocation7], %s26
      %s28 = sshll.u32 [#allocation6], 4
      %s29 = int_to_ptr.vmem [resolvable:$true] %s28
      %34 = dma.hbm_to_vmem [thread:$0]  %s1, 2048, %s29, [#allocation7], 128, 128, 8
    $region9: #{tpu_custom_call.1} parent=1 // pred_fallthru
      _
    // Predicated region
    $region10: #{tpu_custom_call.1} parent=1 // pred_check
      _
    $region11: #{tpu_custom_call.1} parent=1 // pred_check_branch
      %36 = sbr.rel (0) target = $region13
    $region12: #{tpu_custom_call.1} parent=1 // pred_region
      %s38 = ssub.s32 2048, 2048
      %39 = vsyncadd [#allocation7], %s38
      %s40 = sshll.u32 [#allocation8], 4
      %s41 = int_to_ptr.vmem [resolvable:$true] %s40
      %46 = dma.hbm_to_vmem [thread:$0]  %s2, 2048, %s41, [#allocation7], 128, 128, 8
    $region13: #{tpu_custom_call.1} parent=1 // pred_fallthru
      _
    // Predicated region
    $region14: #{tpu_custom_call.1} parent=1 // pred_check
      _
    $region15: #{tpu_custom_call.1} parent=1 // pred_check_branch
      %48 = sbr.rel (0) target = $region17
    $region16: #{tpu_custom_call.1} parent=1 // pred_region
      %49 = dma.done [#allocation4], 256
    $region17: #{tpu_custom_call.1} parent=1 // pred_fallthru
      _
    // Predicated region
    $region18: #{tpu_custom_call.1} parent=1 // pred_check
      _
    $region19: #{tpu_custom_call.1} parent=1 // pred_check_branch
      %51 = sbr.rel (0) target = $region21
    $region20: #{tpu_custom_call.1} parent=1 // pred_region
      %52 = dma.done [#allocation7], 2048
    $region21: #{tpu_custom_call.1} parent=1 // pred_fallthru
      _
    // Predicated region
    $region22: #{tpu_custom_call.1} parent=1 // pred_check
      _
    $region23: #{tpu_custom_call.1} parent=1 // pred_check_branch
      %54 = sbr.rel (0) target = $region25
    $region24: #{tpu_custom_call.1} parent=1 // pred_region
      %55 = dma.done [#allocation7], 2048
    $region25: #{tpu_custom_call.1} parent=1 // pred_fallthru
      _
    %p56 = scmp.eq.s32.totalorder 0, 0
    // Predicated region
    $region26: #{tpu_custom_call.1} parent=1 // pred_check
      %p57 = pneg %p56
    $region27: #{tpu_custom_call.1} parent=1 // pred_check_branch
      %59 = sbr.rel (%p57) target = $region29
    $region28: #{tpu_custom_call.1} parent=1 // pred_region
      %60 = vst [vmem:[#allocation2] sm:$0xff] 0.0
      %61 = vst [vmem:[#allocation2 + $0x8] sm:$0xff] 0.0
    $region29: #{tpu_custom_call.1} parent=1 // pred_fallthru
      _
    %v62 = vld [vmem:[#allocation3] sm:$0xff]
    %v63 = vld [vmem:[#allocation3 + $0x8] sm:$0xff]
    %v64 = vld [vmem:[#allocation6] sm:$0xff]
    %v65 = vld [vmem:[#allocation6 + $0x8] sm:$0xff]
    %v66 = vld [vmem:[#allocation6 + $0x10] sm:$0xff]
    %v67 = vld [vmem:[#allocation6 + $0x18] sm:$0xff]
    %v68 = vld [vmem:[#allocation6 + $0x20] sm:$0xff]
    %v69 = vld [vmem:[#allocation6 + $0x28] sm:$0xff]
    %v70 = vld [vmem:[#allocation6 + $0x30] sm:$0xff]
    %v71 = vld [vmem:[#allocation6 + $0x38] sm:$0xff]
    %v72 = vld [vmem:[#allocation6 + $0x40] sm:$0xff]
    %v73 = vld [vmem:[#allocation6 + $0x48] sm:$0xff]
    %v74 = vld [vmem:[#allocation6 + $0x50] sm:$0xff]
    %v75 = vld [vmem:[#allocation6 + $0x58] sm:$0xff]
    %v76 = vld [vmem:[#allocation6 + $0x60] sm:$0xff]
    %v77 = vld [vmem:[#allocation6 + $0x68] sm:$0xff]
    %v78 = vld [vmem:[#allocation6 + $0x70] sm:$0xff]
    %v79 = vld [vmem:[#allocation6 + $0x78] sm:$0xff]
    %80 = vmatprep.subr.mxu0 0.0
    %81 = vmatpush1.msra.mxu0 %v64
    %82 = vmatprep.subr.mxu0 0.0
    %83 = vmatpush1.msra.mxu0 %v65
    %84 = vmatprep.subr.mxu0 0.0
    %85 = vmatpush1.msra.mxu0 %v66
    %86 = vmatprep.subr.mxu0 0.0
    %87 = vmatpush1.msra.mxu0 %v67
    %88 = vmatprep.subr.mxu0 0.0
    %89 = vmatpush1.msra.mxu0 %v68
    %90 = vmatprep.subr.mxu0 0.0
    %91 = vmatpush1.msra.mxu0 %v69
    %92 = vmatprep.subr.mxu0 0.0
    %93 = vmatpush1.msra.mxu0 %v70
    %94 = vmatprep.subr.mxu0 0.0
    %95 = vmatpush1.msra.mxu0 %v71
    %96 = vmatprep.subr.mxu0 0.0
    %97 = vmatpush1.msra.mxu0 %v72
    %98 = vmatprep.subr.mxu0 0.0
    %99 = vmatpush1.msra.mxu0 %v73
    %100 = vmatprep.subr.mxu0 0.0
    %101 = vmatpush1.msra.mxu0 %v74
    %102 = vmatprep.subr.mxu0 0.0
    %103 = vmatpush1.msra.mxu0 %v75
    %104 = vmatprep.subr.mxu0 0.0
    %105 = vmatpush1.msra.mxu0 %v76
    %106 = vmatprep.subr.mxu0 0.0
    %107 = vmatpush1.msra.mxu0 %v77
    %108 = vmatprep.subr.mxu0 0.0
    %109 = vmatpush1.msra.mxu0 %v78
    %110 = vmatprep.subr.mxu0 0.0
    %111 = vmatpush1.msra.mxu0 %v79
    %112 = vmatprep.subr.mxu0 0.0
    %113 = vmatpush1.msra.mxu0 0.0
    %114 = vmatprep.subr.mxu0 0.0
    %115 = vmatpush1.msra.mxu0 0.0
    %116 = vmatprep.subr.mxu0 0.0
    %117 = vmatpush1.msra.mxu0 0.0
    %118 = vmatprep.subr.mxu0 0.0
    %119 = vmatpush1.msra.mxu0 0.0
    %120 = vmatprep.subr.mxu0 0.0
    %121 = vmatpush1.msra.mxu0 0.0
    %122 = vmatprep.subr.mxu0 0.0
    %123 = vmatpush1.msra.mxu0 0.0
    %124 = vmatprep.subr.mxu0 0.0
    %125 = vmatpush1.msra.mxu0 0.0
    %126 = vmatprep.subr.mxu0 0.0
    %127 = vmatpush1.msra.mxu0 0.0
    %128 = vmatprep.subr.mxu0 0.0
    %129 = vmatpush1.msra.mxu0 0.0
    %130 = vmatprep.subr.mxu0 0.0
    %131 = vmatpush1.msra.mxu0 0.0
    %132 = vmatprep.subr.mxu0 0.0
    %133 = vmatpush1.msra.mxu0 0.0
    %134 = vmatprep.subr.mxu0 0.0
    %135 = vmatpush1.msra.mxu0 0.0
    %136 = vmatprep.subr.mxu0 0.0
    %137 = vmatpush1.msra.mxu0 0.0
    %138 = vmatprep.subr.mxu0 0.0
    %139 = vmatpush1.msra.mxu0 0.0
    %140 = vmatprep.subr.mxu0 0.0
    %141 = vmatpush1.msra.mxu0 0.0
    %142 = vmatprep.subr.mxu0 0.0
    %143 = vmatpush1.msra.mxu0 0.0
    %144 = vmatprep.mubr.f32.mxu0 0.0
    %145 = vmatmul.mubr.f32.gmra.mrb[0].mxu0 %v62
    %v146 = vpop.f32.mrb[0].mxu0
    %v147 = vadd.f32 0.0, %v146
    %v148 = vpop.f32.mrb[0].mxu0
    %149 = vmatprep.mubr.f32.mxu0 0.0
    %150 = vmatmul.mubr.f32.gmra.mrb[0].mxu0 %v63
    %v151 = vpop.f32.mrb[0].mxu0
    %v152 = vadd.f32 0.0, %v151
    %v153 = vpop.f32.mrb[0].mxu0
    %154 = vdwg.mxu0
    %v155 = vmax.f32 %v147, 0.0
    %v156 = vmax.f32 %v152, 0.0
    %v157 = vld [vmem:[#allocation2] sm:$0xff]
    %v158 = vld [vmem:[#allocation2 + $0x8] sm:$0xff]
    %v159 = vld [vmem:[#allocation8] sm:$0xff]
    %v160 = vld [vmem:[#allocation8 + $0x8] sm:$0xff]
    %v161 = vld [vmem:[#allocation8 + $0x10] sm:$0xff]
    %v162 = vld [vmem:[#allocation8 + $0x18] sm:$0xff]
    %v163 = vld [vmem:[#allocation8 + $0x20] sm:$0xff]
    %v164 = vld [vmem:[#allocation8 + $0x28] sm:$0xff]
    %v165 = vld [vmem:[#allocation8 + $0x30] sm:$0xff]
    %v166 = vld [vmem:[#allocation8 + $0x38] sm:$0xff]
    %v167 = vld [vmem:[#allocation8 + $0x40] sm:$0xff]
    %v168 = vld [vmem:[#allocation8 + $0x48] sm:$0xff]
    %v169 = vld [vmem:[#allocation8 + $0x50] sm:$0xff]
    %v170 = vld [vmem:[#allocation8 + $0x58] sm:$0xff]
    %v171 = vld [vmem:[#allocation8 + $0x60] sm:$0xff]
    %v172 = vld [vmem:[#allocation8 + $0x68] sm:$0xff]
    %v173 = vld [vmem:[#allocation8 + $0x70] sm:$0xff]
    %v174 = vld [vmem:[#allocation8 + $0x78] sm:$0xff]
    %175 = vmatprep.subr.mxu0 0.0
    %176 = vmatpush1.msra.mxu0 %v159
    %177 = vmatprep.subr.mxu0 0.0
    %178 = vmatpush1.msra.mxu0 %v160
    %179 = vmatprep.subr.mxu0 0.0
    %180 = vmatpush1.msra.mxu0 %v161
    %181 = vmatprep.subr.mxu0 0.0
    %182 = vmatpush1.msra.mxu0 %v162
    %183 = vmatprep.subr.mxu0 0.0
    %184 = vmatpush1.msra.mxu0 %v163
    %185 = vmatprep.subr.mxu0 0.0
    %186 = vmatpush1.msra.mxu0 %v164
    %187 = vmatprep.subr.mxu0 0.0
    %188 = vmatpush1.msra.mxu0 %v165
    %189 = vmatprep.subr.mxu0 0.0
    %190 = vmatpush1.msra.mxu0 %v166
    %191 = vmatprep.subr.mxu0 0.0
    %192 = vmatpush1.msra.mxu0 %v167
    %193 = vmatprep.subr.mxu0 0.0
    %194 = vmatpush1.msra.mxu0 %v168
    %195 = vmatprep.subr.mxu0 0.0
    %196 = vmatpush1.msra.mxu0 %v169
    %197 = vmatprep.subr.mxu0 0.0
    %198 = vmatpush1.msra.mxu0 %v170
    %199 = vmatprep.subr.mxu0 0.0
    %200 = vmatpush1.msra.mxu0 %v171
    %201 = vmatprep.subr.mxu0 0.0
    %202 = vmatpush1.msra.mxu0 %v172
    %203 = vmatprep.subr.mxu0 0.0
    %204 = vmatpush1.msra.mxu0 %v173
    %205 = vmatprep.subr.mxu0 0.0
    %206 = vmatpush1.msra.mxu0 %v174
    %207 = vmatprep.subr.mxu0 0.0
    %208 = vmatpush1.msra.mxu0 0.0
    %209 = vmatprep.subr.mxu0 0.0
    %210 = vmatpush1.msra.mxu0 0.0
    %211 = vmatprep.subr.mxu0 0.0
    %212 = vmatpush1.msra.mxu0 0.0
    %213 = vmatprep.subr.mxu0 0.0
    %214 = vmatpush1.msra.mxu0 0.0
    %215 = vmatprep.subr.mxu0 0.0
    %216 = vmatpush1.msra.mxu0 0.0
    %217 = vmatprep.subr.mxu0 0.0
    %218 = vmatpush1.msra.mxu0 0.0
    %219 = vmatprep.subr.mxu0 0.0
    %220 = vmatpush1.msra.mxu0 0.0
    %221 = vmatprep.subr.mxu0 0.0
    %222 = vmatpush1.msra.mxu0 0.0
    %223 = vmatprep.subr.mxu0 0.0
    %224 = vmatpush1.msra.mxu0 0.0
    %225 = vmatprep.subr.mxu0 0.0
    %226 = vmatpush1.msra.mxu0 0.0
    %227 = vmatprep.subr.mxu0 0.0
    %228 = vmatpush1.msra.mxu0 0.0
    %229 = vmatprep.subr.mxu0 0.0
    %230 = vmatpush1.msra.mxu0 0.0
    %231 = vmatprep.subr.mxu0 0.0
    %232 = vmatpush1.msra.mxu0 0.0
    %233 = vmatprep.subr.mxu0 0.0
    %234 = vmatpush1.msra.mxu0 0.0
    %235 = vmatprep.subr.mxu0 0.0
    %236 = vmatpush1.msra.mxu0 0.0
    %237 = vmatprep.subr.mxu0 0.0
    %238 = vmatpush1.msra.mxu0 0.0
    %239 = vmatprep.mubr.f32.mxu0 0.0
    %240 = vmatmul.mubr.f32.gmra.mrb[0].mxu0 %v155
    %v241 = vpop.f32.mrb[0].mxu0
    %v242 = vadd.f32 0.0, %v241
    %v243 = vpop.f32.mrb[0].mxu0
    %244 = vmatprep.mubr.f32.mxu0 0.0
    %245 = vmatmul.mubr.f32.gmra.mrb[0].mxu0 %v156
    %v246 = vpop.f32.mrb[0].mxu0
    %v247 = vadd.f32 0.0, %v246
    %v248 = vpop.f32.mrb[0].mxu0
    %249 = vdwg.mxu0
    %v250 = vadd.f32 %v157, %v242
    %v251 = vadd.f32 %v158, %v247
    %252 = vst [vmem:[#allocation2] sm:$0xff] %v250
    %253 = vst [vmem:[#allocation2 + $0x8] sm:$0xff] %v251
    // Predicated region
    $region30: #{tpu_custom_call.1} parent=1 // pred_check
      %p254 = pneg %p56
    $region31: #{tpu_custom_call.1} parent=1 // pred_check_branch
      %256 = sbr.rel (%p254) target = $region33
    $region32: #{tpu_custom_call.1} parent=1 // pred_region
      %v257 = vld [vmem:[#allocation2] sm:$0xff]
      %v258 = vld [vmem:[#allocation2 + $0x8] sm:$0xff]
      %259 = vst [vmem:[#allocation9] sm:$0xff] %v257
      %260 = vst [vmem:[#allocation9 + $0x8] sm:$0xff] %v258
    $region33: #{tpu_custom_call.1} parent=1 // pred_fallthru
      _
    // Predicated region
    $region34: #{tpu_custom_call.1} parent=1 // pred_check
      _
    $region35: #{tpu_custom_call.1} parent=1 // pred_check_branch
      %262 = sbr.rel (0) target = $region37
    $region36: #{tpu_custom_call.1} parent=1 // pred_region
      %s264 = ssub.s32 256, 256
      %265 = vsyncadd [#allocation5], %s264
      %s266 = sshll.u32 [#allocation9], 4
      %s267 = int_to_ptr.vmem [resolvable:$true] %s266
      %272 = dma.vmem_to_hbm [thread:$0]  %s267, 256, %s3, [#allocation5], 128, 128, 8
    $region37: #{tpu_custom_call.1} parent=1 // pred_fallthru
      _
    // Predicated region
    $region38: #{tpu_custom_call.1} parent=1 // pred_check
      _
    $region39: #{tpu_custom_call.1} parent=1 // pred_check_branch
      %274 = sbr.rel (0) target = $region41
    $region40: #{tpu_custom_call.1} parent=1 // pred_region
      %275 = dma.done [#allocation5], 256
    $region41: #{tpu_custom_call.1} parent=1 // pred_fallthru
      _
    %276 = vsyncpa [#allocation4], 1
    %277 = vsyncpa [#allocation7], 1
    %278 = vsyncpa [#allocation5], 1

</llo_original>
